<compile_context>
chip_gen: v7x
topology: tpu7x:2x2x1
jax: 0.10.0
libtpu: 0.0.40
codegen_flags: <defaults>
</compile_context>

<pallas_src>
import functools

import jax
import jax.numpy as jnp
from jax.experimental import pallas as pl
from jax.experimental.pallas import tpu as pltpu


def _round_up(x, m):
    return (x + m - 1) // m * m


def _mlp_block(x, w_ref, b_ref, g_ref, be_ref, *, compute_dtype,
               eps=1e-5, slope=0.1):
    """Linear -> LayerNorm -> LeakyReLU(0.1) on a batch tile.

    Matmul inputs in `compute_dtype` (fp32 or bf16), fp32 accumulation;
    LayerNorm / activation math in fp32.
    """
    xm = x if x.dtype == compute_dtype else x.astype(compute_dtype)
    h = jnp.dot(xm, w_ref[...], preferred_element_type=jnp.float32) + b_ref[...]
    # Two-pass (mean-centered) LayerNorm statistics: robust to large means.
    mu = jnp.mean(h, axis=-1, keepdims=True)
    c = h - mu
    var = jnp.mean(c * c, axis=-1, keepdims=True)
    hn = c * jax.lax.rsqrt(var + eps)
    hn = hn * g_ref[...] + be_ref[...]
    # LeakyReLU(0.1): maximum is correct for slope < 1 and saves a compare.
    return jnp.maximum(hn, slope * hn)


def mappo_policy_kernel(obs_ref,
                        w1_ref, b1_ref, g1_ref, be1_ref,
                        w2_ref, b2_ref, g2_ref, be2_ref,
                        w3_ref, b3_ref, g3_ref, be3_ref,
                        wo_ref, bo_ref,
                        out_ref, *, compute_dtype):
    x = obs_ref[...]  # already in compute_dtype (cast done in the wrapper)
    x = _mlp_block(x, w1_ref, b1_ref, g1_ref, be1_ref, compute_dtype=compute_dtype)
    x = _mlp_block(x, w2_ref, b2_ref, g2_ref, be2_ref, compute_dtype=compute_dtype)
    x = _mlp_block(x, w3_ref, b3_ref, g3_ref, be3_ref, compute_dtype=compute_dtype)
    xm = x if x.dtype == compute_dtype else x.astype(compute_dtype)
    logits = jnp.dot(xm, wo_ref[...], preferred_element_type=jnp.float32) + bo_ref[...]
    out_ref[...] = logits.astype(out_ref.dtype)


def mappo_policy_forward(obs, params, *, batch_tile=None,
                         compute_dtype=jnp.bfloat16, return_padded=False):
    """obs: [B, obs_dim] float32 -> logits [B, n_actions] float32.

    With return_padded=True, returns the lane-dense [B_pad, round_up(n_act,128)]
    buffer directly (no post-kernel slice copy).
    """
    B, obs_dim = obs.shape
    (w1, b1, g1, be1), (w2, b2, g2, be2), (w3, b3, g3, be3), (wo, bo) = params
    hidden = w1.shape[1]
    n_actions = wo.shape[1]
    assert hidden % 128 == 0, "hidden_dim must be a multiple of 128 (LayerNorm dim)"

    # --- batch tile: fill the MXU, amortize per-grid-step overhead ----------
    if batch_tile is None:
        b8 = _round_up(B, 8)
        if b8 <= 256:
            batch_tile = b8                       # single grid step, <=7 pad rows
        else:
            if hidden >= 1024:
                max_tile = 256                    # v7x VMEM budget (64 MiB / 2 TCs)
            elif hidden <= 512:
                max_tile = 1024                   # halve per-step fixed overhead
            else:
                max_tile = 512
            candidates = [t for t in (1024, 512, 256) if t <= max_tile]
            # pick the tile minimizing padded-row waste; ties -> larger tile
            batch_tile = min(candidates, key=lambda t: (_round_up(B, t) - B, -t))
    batch_tile = max(8, _round_up(batch_tile, 8))

    B_pad = _round_up(B, batch_tile)
    n_act_pad = _round_up(n_actions, 128)   # lane-dense output (unmasked vst)

    # --- pad / cast operands in the wrapper ---------------------------------
    # obs feature dim is NOT padded: the block takes the full last-dim extent.
    obs_p = obs.astype(compute_dtype)
    if B_pad != B:
        obs_p = jnp.pad(obs_p, ((0, B_pad - B), (0, 0)))

    wo_p, bo_p = wo, bo
    if n_act_pad != n_actions:
        wo_p = jnp.pad(wo, ((0, 0), (0, n_act_pad - n_actions)))
        bo_p = jnp.pad(bo, ((0, 0), (0, n_act_pad - n_actions)))

    # Matmul weights travel in compute_dtype (halves DMA/VMEM for bf16);
    # biases / LayerNorm params stay fp32.
    w1_p = w1.astype(compute_dtype)
    w2_p = w2.astype(compute_dtype)
    w3_p = w3.astype(compute_dtype)
    wo_p = wo_p.astype(compute_dtype)

    # Parameters are resident: same block every grid step (Mosaic elides the
    # re-DMA for constant index maps).  For large hidden the second pipeline
    # buffer is dead weight -> single-buffer them (matters on v7x: 64 MiB VMEM
    # per TC and both TCs hold their own copy under "parallel").
    single_buffer_params = hidden >= 1024

    def param_spec(shape):
        if single_buffer_params:
            return pl.BlockSpec(shape, lambda i: (0, 0),
                                pipeline_mode=pl.Buffered(1))
        return pl.BlockSpec(shape, lambda i: (0, 0))

    grid = (B_pad // batch_tile,)
    in_specs = [
        pl.BlockSpec((batch_tile, obs_dim), lambda i: (i, 0)),   # obs tile
        param_spec(w1_p.shape), param_spec(b1.shape),
        param_spec(g1.shape), param_spec(be1.shape),
        param_spec(w2_p.shape), param_spec(b2.shape),
        param_spec(g2.shape), param_spec(be2.shape),
        param_spec(w3_p.shape), param_spec(b3.shape),
        param_spec(g3.shape), param_spec(be3.shape),
        param_spec(wo_p.shape), param_spec(bo_p.shape),
    ]
    out_spec = pl.BlockSpec((batch_tile, n_act_pad), lambda i: (i, 0))

    # --- VMEM budget (v5e scoped default is only 16 MiB) --------------------
    w_isz = jnp.dtype(compute_dtype).itemsize
    param_bytes = (obs_dim * hidden + 2 * hidden * hidden
                   + hidden * n_act_pad) * w_isz + (9 * hidden + n_act_pad) * 4
    buf = 1 if single_buffer_params else 2
    io_bytes = 2 * batch_tile * (obs_dim * w_isz + n_act_pad * 4)
    act_bytes = 6 * batch_tile * hidden * 4           # fp32 LN / activation temps
    needed = buf * param_bytes + io_bytes + act_bytes
    vmem_limit = int(min(max(2 * needed, 32 << 20), 64 << 20))

    # --- scheduler hint ------------------------------------------------------
    flops = 2 * B_pad * (obs_dim * hidden + 2 * hidden * hidden
                         + hidden * n_act_pad)
    bytes_accessed = (obs_p.size * w_isz + B_pad * n_act_pad * 4 + param_bytes)
    cost = pl.CostEstimate(flops=flops, transcendentals=3 * B_pad,
                           bytes_accessed=bytes_accessed)

    kernel = functools.partial(mappo_policy_kernel, compute_dtype=compute_dtype)

    out = pl.pallas_call(
        kernel,
        out_shape=jax.ShapeDtypeStruct((B_pad, n_act_pad), jnp.float32),
        grid_spec=pltpu.PrefetchScalarGridSpec(
            num_scalar_prefetch=0,
            grid=grid,
            in_specs=in_specs,
            out_specs=out_spec,
        ),
        compiler_params=pltpu.CompilerParams(
            dimension_semantics=("parallel",),
            vmem_limit_bytes=vmem_limit),
        cost_estimate=cost,
    )(obs_p, w1_p, b1, g1, be1, w2_p, b2, g2, be2, w3_p, b3, g3, be3, wo_p, bo_p)

    if return_padded:
        return out
    return out[:B, :n_actions]


def init_params(key, obs_dim, hidden_dim, n_actions, n_layers=3):
    """PyTorch-style init (uniform(-1/sqrt(fan_in), 1/sqrt(fan_in)))."""
    params = []
    in_dim = obs_dim
    for _ in range(n_layers):
        key, kw, kb = jax.random.split(key, 3)
        bound = 1.0 / jnp.sqrt(jnp.float32(in_dim))
        w = jax.random.uniform(kw, (in_dim, hidden_dim), jnp.float32, -bound, bound)
        b = jax.random.uniform(kb, (1, hidden_dim), jnp.float32, -bound, bound)
        gamma = jnp.ones((1, hidden_dim), jnp.float32)
        beta = jnp.zeros((1, hidden_dim), jnp.float32)
        params.append((w, b, gamma, beta))
        in_dim = hidden_dim
    key, kw, kb = jax.random.split(key, 3)
    bound = 1.0 / jnp.sqrt(jnp.float32(in_dim))
    wo = jax.random.uniform(kw, (in_dim, n_actions), jnp.float32, -bound, bound)
    bo = jax.random.uniform(kb, (1, n_actions), jnp.float32, -bound, bound)
    params.append((wo, bo))
    return tuple(params)


def reference_forward(obs, params):
    (w1, b1, g1, be1), (w2, b2, g2, be2), (w3, b3, g3, be3), (wo, bo) = params

    def blk(x, w, b, g, be):
        h = x @ w + b
        mu = jnp.mean(h, axis=-1, keepdims=True)
        var = jnp.mean((h - mu) ** 2, axis=-1, keepdims=True)
        hn = (h - mu) / jnp.sqrt(var + 1e-5) * g + be
        return jnp.where(hn > 0, hn, 0.1 * hn)

    x = blk(obs, w1, b1, g1, be1)
    x = blk(x, w2, b2, g2, be2)
    x = blk(x, w3, b3, g3, be3)
    return x @ wo + bo


if __name__ == "__main__":
    obs_dim, hidden_dim, n_actions, n_layers = 32, 256, 16, 3
    batch = 16

    key = jax.random.PRNGKey(0)
    key, k_obs = jax.random.split(key)
    obs = jax.random.normal(k_obs, (batch, obs_dim), jnp.float32)
    params = init_params(key, obs_dim, hidden_dim, n_actions, n_layers)

    ref = reference_forward(obs, params)

    # fp32 matmul path: bit-for-bit-close to the reference.
    logits_f32 = mappo_policy_forward(obs, params, compute_dtype=jnp.float32)
    jax.block_until_ready(logits_f32)
    assert logits_f32.shape == (batch, n_actions)
    assert jnp.allclose(logits_f32, ref, atol=1e-4, rtol=1e-4)

    # Default bf16 matmul path (MXU-native on v5e/v6e/v7x): loose tolerance.
    logits = mappo_policy_forward(obs, params)
    jax.block_until_ready(logits)
    assert logits.shape == (batch, n_actions)
    assert bool(jnp.all(jnp.isfinite(logits)))
    assert jnp.allclose(logits, ref, atol=1e-1, rtol=1e-1)

    print("KERNEL_OK")
</pallas_src>

<mosaic_0001>
module attributes {stable_mosaic.version = 11 : i64} {
  func.func @mappo_policy_kernel(%arg0: i32, %arg1: memref<16x32xf32, #tpu.memory_space<vmem>>, %arg2: memref<32x256xf32, #tpu.memory_space<vmem>>, %arg3: memref<1x256xf32, #tpu.memory_space<vmem>>, %arg4: memref<1x256xf32, #tpu.memory_space<vmem>>, %arg5: memref<1x256xf32, #tpu.memory_space<vmem>>, %arg6: memref<256x256xf32, #tpu.memory_space<vmem>>, %arg7: memref<1x256xf32, #tpu.memory_space<vmem>>, %arg8: memref<1x256xf32, #tpu.memory_space<vmem>>, %arg9: memref<1x256xf32, #tpu.memory_space<vmem>>, %arg10: memref<256x256xf32, #tpu.memory_space<vmem>>, %arg11: memref<1x256xf32, #tpu.memory_space<vmem>>, %arg12: memref<1x256xf32, #tpu.memory_space<vmem>>, %arg13: memref<1x256xf32, #tpu.memory_space<vmem>>, %arg14: memref<256x128xf32, #tpu.memory_space<vmem>>, %arg15: memref<1x128xf32, #tpu.memory_space<vmem>>, %arg16: memref<16x128xf32, #tpu.memory_space<vmem>>) attributes {dimension_semantics = [#tpu.dimension_semantics<parallel>], iteration_bounds = array<i64: 1>, scalar_prefetch = 0 : i64, scratch_operands = 0 : i64, tpu.core_type = #tpu.core_type<tc>, window_params = [{transform_indices = @transform_0, window_bounds = array<i64: 16, 32>}, {pipeline_mode = #tpu.pipeline_mode<synchronous>, transform_indices = @transform_1, window_bounds = array<i64: 32, 256>}, {pipeline_mode = #tpu.pipeline_mode<synchronous>, transform_indices = @transform_2, window_bounds = array<i64: 1, 256>}, {pipeline_mode = #tpu.pipeline_mode<synchronous>, transform_indices = @transform_3, window_bounds = array<i64: 1, 256>}, {pipeline_mode = #tpu.pipeline_mode<synchronous>, transform_indices = @transform_4, window_bounds = array<i64: 1, 256>}, {pipeline_mode = #tpu.pipeline_mode<synchronous>, transform_indices = @transform_5, window_bounds = array<i64: 256, 256>}, {pipeline_mode = #tpu.pipeline_mode<synchronous>, transform_indices = @transform_6, window_bounds = array<i64: 1, 256>}, {pipeline_mode = #tpu.pipeline_mode<synchronous>, transform_indices = @transform_7, window_bounds = array<i64: 1, 256>}, {pipeline_mode = #tpu.pipeline_mode<synchronous>, transform_indices = @transform_8, window_bounds = array<i64: 1, 256>}, {pipeline_mode = #tpu.pipeline_mode<synchronous>, transform_indices = @transform_9, window_bounds = array<i64: 256, 256>}, {pipeline_mode = #tpu.pipeline_mode<synchronous>, transform_indices = @transform_10, window_bounds = array<i64: 1, 256>}, {pipeline_mode = #tpu.pipeline_mode<synchronous>, transform_indices = @transform_11, window_bounds = array<i64: 1, 256>}, {pipeline_mode = #tpu.pipeline_mode<synchronous>, transform_indices = @transform_12, window_bounds = array<i64: 1, 256>}, {pipeline_mode = #tpu.pipeline_mode<synchronous>, transform_indices = @transform_13, window_bounds = array<i64: 256, 128>}, {pipeline_mode = #tpu.pipeline_mode<synchronous>, transform_indices = @transform_14, window_bounds = array<i64: 1, 128>}, {transform_indices = @transform_15, window_bounds = array<i64: 16, 128>}]} {
    %c0 = arith.constant 0 : index
    %c0_0 = arith.constant 0 : index
    %0 = vector.load %arg1[%c0, %c0_0] : memref<16x32xf32, #tpu.memory_space<vmem>>, vector<16x32xf32>
    %c0_1 = arith.constant 0 : index
    %c0_2 = arith.constant 0 : index
    %1 = vector.load %arg2[%c0_1, %c0_2] : memref<32x256xf32, #tpu.memory_space<vmem>>, vector<32x256xf32>
    %cst = arith.constant dense<0.000000e+00> : vector<16x256xf32>
    %2 = tpu.matmul %0, %1, %cst {dimension_numbers = #tpu.dot_dimension_numbers<[1], [0], [0], [1], [0, 0, 1, 1], [], []>} : vector<16x32xf32>, vector<32x256xf32>, vector<16x256xf32> -> vector<16x256xf32>
    %c0_3 = arith.constant 0 : index
    %c0_4 = arith.constant 0 : index
    %3 = vector.load %arg3[%c0_3, %c0_4] : memref<1x256xf32, #tpu.memory_space<vmem>>, vector<1x256xf32>
    %4 = vector.broadcast %3 : vector<1x256xf32> to vector<16x256xf32>
    %5 = arith.addf %2, %4 : vector<16x256xf32>
    %cst_5 = arith.constant dense<0.000000e+00> : vector<16xf32>
    %6 = vector.multi_reduction <add>, %5, %cst_5 [1] : vector<16x256xf32> to vector<16xf32>
    %7 = vector.shape_cast %6 : vector<16xf32> to vector<16x1xf32>
    %cst_6 = arith.constant 2.560000e+02 : f32
    %8 = vector.broadcast %cst_6 : f32 to vector<16x1xf32>
    %9 = arith.divf %7, %8 : vector<16x1xf32>
    %10 = vector.broadcast %9 : vector<16x1xf32> to vector<16x256xf32>
    %11 = arith.subf %5, %10 : vector<16x256xf32>
    %12 = arith.mulf %11, %11 : vector<16x256xf32>
    %cst_7 = arith.constant dense<0.000000e+00> : vector<16xf32>
    %13 = vector.multi_reduction <add>, %12, %cst_7 [1] : vector<16x256xf32> to vector<16xf32>
    %14 = vector.shape_cast %13 : vector<16xf32> to vector<16x1xf32>
    %cst_8 = arith.constant 2.560000e+02 : f32
    %15 = vector.broadcast %cst_8 : f32 to vector<16x1xf32>
    %16 = arith.divf %14, %15 : vector<16x1xf32>
    %cst_9 = arith.constant 9.99999974E-6 : f32
    %17 = vector.broadcast %cst_9 : f32 to vector<16x1xf32>
    %18 = arith.addf %16, %17 : vector<16x1xf32>
    %19 = math.rsqrt %18 : vector<16x1xf32>
    %20 = vector.broadcast %19 : vector<16x1xf32> to vector<16x256xf32>
    %21 = arith.mulf %11, %20 : vector<16x256xf32>
    %c0_10 = arith.constant 0 : index
    %c0_11 = arith.constant 0 : index
    %22 = vector.load %arg4[%c0_10, %c0_11] : memref<1x256xf32, #tpu.memory_space<vmem>>, vector<1x256xf32>
    %23 = vector.broadcast %22 : vector<1x256xf32> to vector<16x256xf32>
    %24 = arith.mulf %21, %23 : vector<16x256xf32>
    %c0_12 = arith.constant 0 : index
    %c0_13 = arith.constant 0 : index
    %25 = vector.load %arg5[%c0_12, %c0_13] : memref<1x256xf32, #tpu.memory_space<vmem>>, vector<1x256xf32>
    %26 = vector.broadcast %25 : vector<1x256xf32> to vector<16x256xf32>
    %27 = arith.addf %24, %26 : vector<16x256xf32>
    %cst_14 = arith.constant 1.000000e-01 : f32
    %28 = vector.broadcast %cst_14 : f32 to vector<16x256xf32>
    %29 = arith.mulf %28, %27 : vector<16x256xf32>
    %30 = arith.maximumf %27, %29 : vector<16x256xf32>
    %c0_15 = arith.constant 0 : index
    %c0_16 = arith.constant 0 : index
    %31 = vector.load %arg6[%c0_15, %c0_16] : memref<256x256xf32, #tpu.memory_space<vmem>>, vector<256x256xf32>
    %cst_17 = arith.constant dense<0.000000e+00> : vector<16x256xf32>
    %32 = tpu.matmul %30, %31, %cst_17 {dimension_numbers = #tpu.dot_dimension_numbers<[1], [0], [0], [1], [0, 0, 1, 1], [], []>} : vector<16x256xf32>, vector<256x256xf32>, vector<16x256xf32> -> vector<16x256xf32>
    %c0_18 = arith.constant 0 : index
    %c0_19 = arith.constant 0 : index
    %33 = vector.load %arg7[%c0_18, %c0_19] : memref<1x256xf32, #tpu.memory_space<vmem>>, vector<1x256xf32>
    %34 = vector.broadcast %33 : vector<1x256xf32> to vector<16x256xf32>
    %35 = arith.addf %32, %34 : vector<16x256xf32>
    %cst_20 = arith.constant dense<0.000000e+00> : vector<16xf32>
    %36 = vector.multi_reduction <add>, %35, %cst_20 [1] : vector<16x256xf32> to vector<16xf32>
    %37 = vector.shape_cast %36 : vector<16xf32> to vector<16x1xf32>
    %cst_21 = arith.constant 2.560000e+02 : f32
    %38 = vector.broadcast %cst_21 : f32 to vector<16x1xf32>
    %39 = arith.divf %37, %38 : vector<16x1xf32>
    %40 = vector.broadcast %39 : vector<16x1xf32> to vector<16x256xf32>
    %41 = arith.subf %35, %40 : vector<16x256xf32>
    %42 = arith.mulf %41, %41 : vector<16x256xf32>
    %cst_22 = arith.constant dense<0.000000e+00> : vector<16xf32>
    %43 = vector.multi_reduction <add>, %42, %cst_22 [1] : vector<16x256xf32> to vector<16xf32>
    %44 = vector.shape_cast %43 : vector<16xf32> to vector<16x1xf32>
    %cst_23 = arith.constant 2.560000e+02 : f32
    %45 = vector.broadcast %cst_23 : f32 to vector<16x1xf32>
    %46 = arith.divf %44, %45 : vector<16x1xf32>
    %cst_24 = arith.constant 9.99999974E-6 : f32
    %47 = vector.broadcast %cst_24 : f32 to vector<16x1xf32>
    %48 = arith.addf %46, %47 : vector<16x1xf32>
    %49 = math.rsqrt %48 : vector<16x1xf32>
    %50 = vector.broadcast %49 : vector<16x1xf32> to vector<16x256xf32>
    %51 = arith.mulf %41, %50 : vector<16x256xf32>
    %c0_25 = arith.constant 0 : index
    %c0_26 = arith.constant 0 : index
    %52 = vector.load %arg8[%c0_25, %c0_26] : memref<1x256xf32, #tpu.memory_space<vmem>>, vector<1x256xf32>
    %53 = vector.broadcast %52 : vector<1x256xf32> to vector<16x256xf32>
    %54 = arith.mulf %51, %53 : vector<16x256xf32>
    %c0_27 = arith.constant 0 : index
    %c0_28 = arith.constant 0 : index
    %55 = vector.load %arg9[%c0_27, %c0_28] : memref<1x256xf32, #tpu.memory_space<vmem>>, vector<1x256xf32>
    %56 = vector.broadcast %55 : vector<1x256xf32> to vector<16x256xf32>
    %57 = arith.addf %54, %56 : vector<16x256xf32>
    %cst_29 = arith.constant 1.000000e-01 : f32
    %58 = vector.broadcast %cst_29 : f32 to vector<16x256xf32>
    %59 = arith.mulf %58, %57 : vector<16x256xf32>
    %60 = arith.maximumf %57, %59 : vector<16x256xf32>
    %c0_30 = arith.constant 0 : index
    %c0_31 = arith.constant 0 : index
    %61 = vector.load %arg10[%c0_30, %c0_31] : memref<256x256xf32, #tpu.memory_space<vmem>>, vector<256x256xf32>
    %cst_32 = arith.constant dense<0.000000e+00> : vector<16x256xf32>
    %62 = tpu.matmul %60, %61, %cst_32 {dimension_numbers = #tpu.dot_dimension_numbers<[1], [0], [0], [1], [0, 0, 1, 1], [], []>} : vector<16x256xf32>, vector<256x256xf32>, vector<16x256xf32> -> vector<16x256xf32>
    %c0_33 = arith.constant 0 : index
    %c0_34 = arith.constant 0 : index
    %63 = vector.load %arg11[%c0_33, %c0_34] : memref<1x256xf32, #tpu.memory_space<vmem>>, vector<1x256xf32>
    %64 = vector.broadcast %63 : vector<1x256xf32> to vector<16x256xf32>
    %65 = arith.addf %62, %64 : vector<16x256xf32>
    %cst_35 = arith.constant dense<0.000000e+00> : vector<16xf32>
    %66 = vector.multi_reduction <add>, %65, %cst_35 [1] : vector<16x256xf32> to vector<16xf32>
    %67 = vector.shape_cast %66 : vector<16xf32> to vector<16x1xf32>
    %cst_36 = arith.constant 2.560000e+02 : f32
    %68 = vector.broadcast %cst_36 : f32 to vector<16x1xf32>
    %69 = arith.divf %67, %68 : vector<16x1xf32>
    %70 = vector.broadcast %69 : vector<16x1xf32> to vector<16x256xf32>
    %71 = arith.subf %65, %70 : vector<16x256xf32>
    %72 = arith.mulf %71, %71 : vector<16x256xf32>
    %cst_37 = arith.constant dense<0.000000e+00> : vector<16xf32>
    %73 = vector.multi_reduction <add>, %72, %cst_37 [1] : vector<16x256xf32> to vector<16xf32>
    %74 = vector.shape_cast %73 : vector<16xf32> to vector<16x1xf32>
    %cst_38 = arith.constant 2.560000e+02 : f32
    %75 = vector.broadcast %cst_38 : f32 to vector<16x1xf32>
    %76 = arith.divf %74, %75 : vector<16x1xf32>
    %cst_39 = arith.constant 9.99999974E-6 : f32
    %77 = vector.broadcast %cst_39 : f32 to vector<16x1xf32>
    %78 = arith.addf %76, %77 : vector<16x1xf32>
    %79 = math.rsqrt %78 : vector<16x1xf32>
    %80 = vector.broadcast %79 : vector<16x1xf32> to vector<16x256xf32>
    %81 = arith.mulf %71, %80 : vector<16x256xf32>
    %c0_40 = arith.constant 0 : index
    %c0_41 = arith.constant 0 : index
    %82 = vector.load %arg12[%c0_40, %c0_41] : memref<1x256xf32, #tpu.memory_space<vmem>>, vector<1x256xf32>
    %83 = vector.broadcast %82 : vector<1x256xf32> to vector<16x256xf32>
    %84 = arith.mulf %81, %83 : vector<16x256xf32>
    %c0_42 = arith.constant 0 : index
    %c0_43 = arith.constant 0 : index
    %85 = vector.load %arg13[%c0_42, %c0_43] : memref<1x256xf32, #tpu.memory_space<vmem>>, vector<1x256xf32>
    %86 = vector.broadcast %85 : vector<1x256xf32> to vector<16x256xf32>
    %87 = arith.addf %84, %86 : vector<16x256xf32>
    %cst_44 = arith.constant 1.000000e-01 : f32
    %88 = vector.broadcast %cst_44 : f32 to vector<16x256xf32>
    %89 = arith.mulf %88, %87 : vector<16x256xf32>
    %90 = arith.maximumf %87, %89 : vector<16x256xf32>
    %c0_45 = arith.constant 0 : index
    %c0_46 = arith.constant 0 : index
    %91 = vector.load %arg14[%c0_45, %c0_46] : memref<256x128xf32, #tpu.memory_space<vmem>>, vector<256x128xf32>
    %cst_47 = arith.constant dense<0.000000e+00> : vector<16x128xf32>
    %92 = tpu.matmul %90, %91, %cst_47 {dimension_numbers = #tpu.dot_dimension_numbers<[1], [0], [0], [1], [0, 0, 1, 1], [], []>} : vector<16x256xf32>, vector<256x128xf32>, vector<16x128xf32> -> vector<16x128xf32>
    %c0_48 = arith.constant 0 : index
    %c0_49 = arith.constant 0 : index
    %93 = vector.load %arg15[%c0_48, %c0_49] : memref<1x128xf32, #tpu.memory_space<vmem>>, vector<1x128xf32>
    %94 = vector.broadcast %93 : vector<1x128xf32> to vector<16x128xf32>
    %95 = arith.addf %92, %94 : vector<16x128xf32>
    %c0_50 = arith.constant 0 : index
    %c0_51 = arith.constant 0 : index
    %96 = vector.load %arg16[%c0_50, %c0_51] : memref<16x128xf32, #tpu.memory_space<vmem>>, vector<16x128xf32>
    tpu.vector_store %arg16[%c0_50, %c0_51], %95 {strides = array<i32>} : memref<16x128xf32, #tpu.memory_space<vmem>>, vector<16x128xf32>,
    return
  }
  func.func @transform_0(%arg0: i32) -> (i32, i32) {
    %c0_i32 = arith.constant 0 : i32
    %c0_i32_0 = arith.constant 0 : i32
    return %arg0, %c0_i32 : i32, i32
  }
  func.func @transform_1(%arg0: i32) -> (i32, i32) {
    %c0_i32 = arith.constant 0 : i32
    %c0_i32_0 = arith.constant 0 : i32
    %c0_i32_1 = arith.constant 0 : i32
    return %c0_i32, %c0_i32_0 : i32, i32
  }
  func.func @transform_2(%arg0: i32) -> (i32, i32) {
    %c0_i32 = arith.constant 0 : i32
    %c0_i32_0 = arith.constant 0 : i32
    %c0_i32_1 = arith.constant 0 : i32
    return %c0_i32, %c0_i32_0 : i32, i32
  }
  func.func @transform_3(%arg0: i32) -> (i32, i32) {
    %c0_i32 = arith.constant 0 : i32
    %c0_i32_0 = arith.constant 0 : i32
    %c0_i32_1 = arith.constant 0 : i32
    return %c0_i32, %c0_i32_0 : i32, i32
  }
  func.func @transform_4(%arg0: i32) -> (i32, i32) {
    %c0_i32 = arith.constant 0 : i32
    %c0_i32_0 = arith.constant 0 : i32
    %c0_i32_1 = arith.constant 0 : i32
    return %c0_i32, %c0_i32_0 : i32, i32
  }
  func.func @transform_5(%arg0: i32) -> (i32, i32) {
    %c0_i32 = arith.constant 0 : i32
    %c0_i32_0 = arith.constant 0 : i32
    %c0_i32_1 = arith.constant 0 : i32
    return %c0_i32, %c0_i32_0 : i32, i32
  }
  func.func @transform_6(%arg0: i32) -> (i32, i32) {
    %c0_i32 = arith.constant 0 : i32
    %c0_i32_0 = arith.constant 0 : i32
    %c0_i32_1 = arith.constant 0 : i32
    return %c0_i32, %c0_i32_0 : i32, i32
  }
  func.func @transform_7(%arg0: i32) -> (i32, i32) {
    %c0_i32 = arith.constant 0 : i32
    %c0_i32_0 = arith.constant 0 : i32
    %c0_i32_1 = arith.constant 0 : i32
    return %c0_i32, %c0_i32_0 : i32, i32
  }
  func.func @transform_8(%arg0: i32) -> (i32, i32) {
    %c0_i32 = arith.constant 0 : i32
    %c0_i32_0 = arith.constant 0 : i32
    %c0_i32_1 = arith.constant 0 : i32
    return %c0_i32, %c0_i32_0 : i32, i32
  }
  func.func @transform_9(%arg0: i32) -> (i32, i32) {
    %c0_i32 = arith.constant 0 : i32
    %c0_i32_0 = arith.constant 0 : i32
    %c0_i32_1 = arith.constant 0 : i32
    return %c0_i32, %c0_i32_0 : i32, i32
  }
  func.func @transform_10(%arg0: i32) -> (i32, i32) {
    %c0_i32 = arith.constant 0 : i32
    %c0_i32_0 = arith.constant 0 : i32
    %c0_i32_1 = arith.constant 0 : i32
    return %c0_i32, %c0_i32_0 : i32, i32
  }
  func.func @transform_11(%arg0: i32) -> (i32, i32) {
    %c0_i32 = arith.constant 0 : i32
    %c0_i32_0 = arith.constant 0 : i32
    %c0_i32_1 = arith.constant 0 : i32
    return %c0_i32, %c0_i32_0 : i32, i32
  }
  func.func @transform_12(%arg0: i32) -> (i32, i32) {
    %c0_i32 = arith.constant 0 : i32
    %c0_i32_0 = arith.constant 0 : i32
    %c0_i32_1 = arith.constant 0 : i32
    return %c0_i32, %c0_i32_0 : i32, i32
  }
  func.func @transform_13(%arg0: i32) -> (i32, i32) {
    %c0_i32 = arith.constant 0 : i32
    %c0_i32_0 = arith.constant 0 : i32
    %c0_i32_1 = arith.constant 0 : i32
    return %c0_i32, %c0_i32_0 : i32, i32
  }
  func.func @transform_14(%arg0: i32) -> (i32, i32) {
    %c0_i32 = arith.constant 0 : i32
    %c0_i32_0 = arith.constant 0 : i32
    %c0_i32_1 = arith.constant 0 : i32
    return %c0_i32, %c0_i32_0 : i32, i32
  }
  func.func @transform_15(%arg0: i32) -> (i32, i32) {
    %c0_i32 = arith.constant 0 : i32
    %c0_i32_0 = arith.constant 0 : i32
    return %arg0, %c0_i32 : i32, i32
  }
}

</mosaic_0001>

<llo_original>
// kernel: tpu_custom_call.1
$region0: #{tpu_custom_call.1}
  #allocation0 [shape = 'u32[]', space=smem, size = 0x4, offset = 0x4, fixed_abs, tag = 'smem constant byte address 0x4 - core index']
  #allocation1 [shape = 'u32[144,128]{1,0:T(1,128)}', space=vmem, size = 0x12000, scoped, tag = 'internal scratch']
  %s0 = inlined_call_operand.hbm [shape: f32[16,32], index: 0, kind: input, shape index: {}]
  %s1 = inlined_call_operand.hbm [shape: f32[32,256], index: 1, kind: input, shape index: {}]
  %s2 = inlined_call_operand.vmem [shape: f32[1,256], index: 2, kind: input, shape index: {}]
  %s3 = inlined_call_operand.vmem [shape: f32[1,256], index: 3, kind: input, shape index: {}]
  %s4 = inlined_call_operand.vmem [shape: f32[1,256], index: 4, kind: input, shape index: {}]
  %s5 = inlined_call_operand.hbm [shape: f32[256,256], index: 5, kind: input, shape index: {}]
  %s6 = inlined_call_operand.vmem [shape: f32[1,256], index: 6, kind: input, shape index: {}]
  %s7 = inlined_call_operand.vmem [shape: f32[1,256], index: 7, kind: input, shape index: {}]
  %s8 = inlined_call_operand.vmem [shape: f32[1,256], index: 8, kind: input, shape index: {}]
  %s9 = inlined_call_operand.hbm [shape: f32[256,256], index: 9, kind: input, shape index: {}]
  %s10 = inlined_call_operand.vmem [shape: f32[1,256], index: 10, kind: input, shape index: {}]
  %s11 = inlined_call_operand.vmem [shape: f32[1,256], index: 11, kind: input, shape index: {}]
  %s12 = inlined_call_operand.vmem [shape: f32[1,256], index: 12, kind: input, shape index: {}]
  %s13 = inlined_call_operand.hbm [shape: f32[256,128], index: 13, kind: input, shape index: {}]
  %s14 = inlined_call_operand.vmem [shape: f32[1,128], index: 14, kind: input, shape index: {}]
  %s15 = inlined_call_operand.hbm [shape: f32[16,128], index: 15, kind: output, shape index: {}]
  %s16 = sld [smem:[#allocation0]]
  $region90: #{tpu_custom_call.1} parent=0
    _
  %s18 = ssub.s32 1, %s16
  %s19 = scalar_select 0, %s18, %s16
  $region1: #{tpu_custom_call.1} parent=0
    #allocation2 [shape = 'u8[8192]{0}', space=vmem, size = 0x2000, scoped, tag = 'input window, operand 0, single buffered']
    #allocation3 [shape = 's32[1]{0}', space=sflag, size = 0x4, scoped, tag = 'scoped memory for tpu_custom_call.1']
    #allocation4 [shape = 's32[1]{0}', space=sflag, size = 0x4, scoped, tag = 'scoped memory for tpu_custom_call.1']
    #allocation5 [shape = 'u8[32768]{0}', space=vmem, size = 0x8000, scoped, tag = 'input window, operand 1, single buffered']
    #allocation6 [shape = 's32[1]{0}', space=sflag, size = 0x4, scoped, tag = 'scoped memory for tpu_custom_call.1']
    #allocation7 [shape = 'u8[262144]{0}', space=vmem, size = 0x40000, scoped, tag = 'input window, operand 5, single buffered']
    #allocation8 [shape = 'u8[262144]{0}', space=vmem, size = 0x40000, scoped, tag = 'input window, operand 9, single buffered']
    #allocation9 [shape = 's32[1]{0}', space=sflag, size = 0x4, scoped, tag = 'scoped memory for tpu_custom_call.1']
    #allocation10 [shape = 'u8[131072]{0}', space=vmem, size = 0x20000, scoped, tag = 'input window, operand 13, single buffered']
    #allocation11 [shape = 'u8[8192]{0}', space=vmem, size = 0x2000, scoped, tag = 'output window, operand 0, single buffered']
    %20 = vsyncpa [#allocation3], 0
    %21 = vsyncpa [#allocation6], 0
    %22 = vsyncpa [#allocation9], 0
    %23 = vsyncpa [#allocation4], 0
    // Predicated region
    $region2: #{tpu_custom_call.1} parent=1 // pred_check
      _
    $region3: #{tpu_custom_call.1} parent=1 // pred_check_branch
      %25 = sbr.rel (0) target = $region5
    $region4: #{tpu_custom_call.1} parent=1 // pred_region
      %s27 = ssub.s32 256, 256
      %28 = vsyncadd [#allocation3], %s27
      %s29 = sshll.u32 [#allocation2], 4
      %s30 = int_to_ptr.vmem [resolvable:$true] %s29
      %35 = dma.hbm_to_vmem [thread:$0]  %s0, 256, %s30, [#allocation3], 128, 128, 8
    $region5: #{tpu_custom_call.1} parent=1 // pred_fallthru
      _
    // Predicated region
    $region6: #{tpu_custom_call.1} parent=1 // pred_check
      _
    $region7: #{tpu_custom_call.1} parent=1 // pred_check_branch
      %37 = sbr.rel (0) target = $region9
    $region8: #{tpu_custom_call.1} parent=1 // pred_region
      %s39 = ssub.s32 1024, 1024
      %40 = vsyncadd [#allocation6], %s39
      %s41 = sshll.u32 [#allocation5], 4
      %s42 = int_to_ptr.vmem [resolvable:$true] %s41
      %47 = dma.hbm_to_vmem [thread:$0]  %s1, 1024, %s42, [#allocation6], 256, 256, 16
    $region9: #{tpu_custom_call.1} parent=1 // pred_fallthru
      _
    // Predicated region
    $region10: #{tpu_custom_call.1} parent=1 // pred_check
      _
    $region11: #{tpu_custom_call.1} parent=1 // pred_check_branch
      %49 = sbr.rel (0) target = $region13
    $region12: #{tpu_custom_call.1} parent=1 // pred_region
      _
    $region13: #{tpu_custom_call.1} parent=1 // pred_fallthru
      _
    // Predicated region
    $region14: #{tpu_custom_call.1} parent=1 // pred_check
      _
    $region15: #{tpu_custom_call.1} parent=1 // pred_check_branch
      %51 = sbr.rel (0) target = $region17
    $region16: #{tpu_custom_call.1} parent=1 // pred_region
      _
    $region17: #{tpu_custom_call.1} parent=1 // pred_fallthru
      _
    // Predicated region
    $region18: #{tpu_custom_call.1} parent=1 // pred_check
      _
    $region19: #{tpu_custom_call.1} parent=1 // pred_check_branch
      %53 = sbr.rel (0) target = $region21
    $region20: #{tpu_custom_call.1} parent=1 // pred_region
      _
    $region21: #{tpu_custom_call.1} parent=1 // pred_fallthru
      _
    // Predicated region
    $region22: #{tpu_custom_call.1} parent=1 // pred_check
      _
    $region23: #{tpu_custom_call.1} parent=1 // pred_check_branch
      %55 = sbr.rel (0) target = $region25
    $region24: #{tpu_custom_call.1} parent=1 // pred_region
      %s57 = ssub.s32 8192, 8192
      %58 = vsyncadd [#allocation6], %s57
      %s59 = sshll.u32 [#allocation7], 4
      %s60 = int_to_ptr.vmem [resolvable:$true] %s59
      %65 = dma.hbm_to_vmem [thread:$0]  %s5, 8192, %s60, [#allocation6], 256, 256, 16
    $region25: #{tpu_custom_call.1} parent=1 // pred_fallthru
      _
    // Predicated region
    $region26: #{tpu_custom_call.1} parent=1 // pred_check
      _
    $region27: #{tpu_custom_call.1} parent=1 // pred_check_branch
      %67 = sbr.rel (0) target = $region29
    $region28: #{tpu_custom_call.1} parent=1 // pred_region
      _
    $region29: #{tpu_custom_call.1} parent=1 // pred_fallthru
      _
    // Predicated region
    $region30: #{tpu_custom_call.1} parent=1 // pred_check
      _
    $region31: #{tpu_custom_call.1} parent=1 // pred_check_branch
      %69 = sbr.rel (0) target = $region33
    $region32: #{tpu_custom_call.1} parent=1 // pred_region
      _
    $region33: #{tpu_custom_call.1} parent=1 // pred_fallthru
      _
    // Predicated region
    $region34: #{tpu_custom_call.1} parent=1 // pred_check
      _
    $region35: #{tpu_custom_call.1} parent=1 // pred_check_branch
      %71 = sbr.rel (0) target = $region37
    $region36: #{tpu_custom_call.1} parent=1 // pred_region
      _
    $region37: #{tpu_custom_call.1} parent=1 // pred_fallthru
      _
    // Predicated region
    $region38: #{tpu_custom_call.1} parent=1 // pred_check
      _
    $region39: #{tpu_custom_call.1} parent=1 // pred_check_branch
      %73 = sbr.rel (0) target = $region41
    $region40: #{tpu_custom_call.1} parent=1 // pred_region
      %s75 = ssub.s32 8192, 8192
      %76 = vsyncadd [#allocation9], %s75
      %s77 = sshll.u32 [#allocation8], 4
      %s78 = int_to_ptr.vmem [resolvable:$true] %s77
      %83 = dma.hbm_to_vmem [thread:$0]  %s9, 8192, %s78, [#allocation9], 256, 256, 16
    $region41: #{tpu_custom_call.1} parent=1 // pred_fallthru
      _
    // Predicated region
    $region42: #{tpu_custom_call.1} parent=1 // pred_check
      _
    $region43: #{tpu_custom_call.1} parent=1 // pred_check_branch
      %85 = sbr.rel (0) target = $region45
    $region44: #{tpu_custom_call.1} parent=1 // pred_region
      _
    $region45: #{tpu_custom_call.1} parent=1 // pred_fallthru
      _
    // Predicated region
    $region46: #{tpu_custom_call.1} parent=1 // pred_check
      _
    $region47: #{tpu_custom_call.1} parent=1 // pred_check_branch
      %87 = sbr.rel (0) target = $region49
    $region48: #{tpu_custom_call.1} parent=1 // pred_region
      _
    $region49: #{tpu_custom_call.1} parent=1 // pred_fallthru
      _
    // Predicated region
    $region50: #{tpu_custom_call.1} parent=1 // pred_check
      _
    $region51: #{tpu_custom_call.1} parent=1 // pred_check_branch
      %89 = sbr.rel (0) target = $region53
    $region52: #{tpu_custom_call.1} parent=1 // pred_region
      _
    $region53: #{tpu_custom_call.1} parent=1 // pred_fallthru
      _
    // Predicated region
    $region54: #{tpu_custom_call.1} parent=1 // pred_check
      _
    $region55: #{tpu_custom_call.1} parent=1 // pred_check_branch
      %91 = sbr.rel (0) target = $region57
    $region56: #{tpu_custom_call.1} parent=1 // pred_region
      %s93 = ssub.s32 4096, 4096
      %94 = vsyncadd [#allocation9], %s93
      %s95 = sshll.u32 [#allocation10], 4
      %s96 = int_to_ptr.vmem [resolvable:$true] %s95
      %101 = dma.hbm_to_vmem [thread:$0]  %s13, 4096, %s96, [#allocation9], 128, 128, 8
    $region57: #{tpu_custom_call.1} parent=1 // pred_fallthru
      _
    // Predicated region
    $region58: #{tpu_custom_call.1} parent=1 // pred_check
      _
    $region59: #{tpu_custom_call.1} parent=1 // pred_check_branch
      %103 = sbr.rel (0) target = $region61
    $region60: #{tpu_custom_call.1} parent=1 // pred_region
      _
    $region61: #{tpu_custom_call.1} parent=1 // pred_fallthru
      _
    // Predicated region
    $region62: #{tpu_custom_call.1} parent=1 // pred_check
      _
    $region63: #{tpu_custom_call.1} parent=1 // pred_check_branch
      %105 = sbr.rel (0) target = $region65
    $region64: #{tpu_custom_call.1} parent=1 // pred_region
      %106 = dma.done [#allocation3], 256
    $region65: #{tpu_custom_call.1} parent=1 // pred_fallthru
      _
    // Predicated region
    $region66: #{tpu_custom_call.1} parent=1 // pred_check
      _
    $region67: #{tpu_custom_call.1} parent=1 // pred_check_branch
      %108 = sbr.rel (0) target = $region69
    $region68: #{tpu_custom_call.1} parent=1 // pred_region
      %109 = dma.done [#allocation6], 1024
    $region69: #{tpu_custom_call.1} parent=1 // pred_fallthru
      _
    // Predicated region
    $region70: #{tpu_custom_call.1} parent=1 // pred_check
      _
    $region71: #{tpu_custom_call.1} parent=1 // pred_check_branch
      %111 = sbr.rel (0) target = $region73
    $region72: #{tpu_custom_call.1} parent=1 // pred_region
      %112 = dma.done [#allocation6], 8192
    $region73: #{tpu_custom_call.1} parent=1 // pred_fallthru
      _
    // Predicated region
    $region74: #{tpu_custom_call.1} parent=1 // pred_check
      _
    $region75: #{tpu_custom_call.1} parent=1 // pred_check_branch
      %114 = sbr.rel (0) target = $region77
    $region76: #{tpu_custom_call.1} parent=1 // pred_region
      %115 = dma.done [#allocation9], 8192
    $region77: #{tpu_custom_call.1} parent=1 // pred_fallthru
      _
    // Predicated region
    $region78: #{tpu_custom_call.1} parent=1 // pred_check
      _
    $region79: #{tpu_custom_call.1} parent=1 // pred_check_branch
      %117 = sbr.rel (0) target = $region81
    $region80: #{tpu_custom_call.1} parent=1 // pred_region
      %118 = dma.done [#allocation9], 4096
    $region81: #{tpu_custom_call.1} parent=1 // pred_fallthru
      _
    %v119 = vld [vmem:[#allocation2] sm:$0xff]
    %v120 = vld [vmem:[#allocation2 + $0x8] sm:$0xff]
    %v121 = vld [vmem:[#allocation5] sm:$0xff]
    %v122 = vld [vmem:[#allocation5 + $0x8] sm:$0xff]
    %v123 = vld [vmem:[#allocation5 + $0x10] sm:$0xff]
    %v124 = vld [vmem:[#allocation5 + $0x18] sm:$0xff]
    %v125 = vld [vmem:[#allocation5 + $0x20] sm:$0xff]
    %v126 = vld [vmem:[#allocation5 + $0x28] sm:$0xff]
    %v127 = vld [vmem:[#allocation5 + $0x30] sm:$0xff]
    %v128 = vld [vmem:[#allocation5 + $0x38] sm:$0xff]
    %v129 = vld [vmem:[%s2] sm:$0x3]
    %v131 = vlaneseq
    %v132 = vshrl.u32 %v131, 7
    %v133 = vsub.s32 0, %v132
    %v134 = vrot.slane %v129, %v133
    %v135 = vlaneseq
    %v136 = vshrl.u32 %v135, 7
    %v137 = vsub.s32 1, %v136
    %v138 = vrot.slane %v129, %v137
    %vm141 = vcmask 261120
    %v143 = vsel %vm141, %v119, 0
    %v146 = vsel %vm141, %v120, 0
    %148 = vmatprep.subr.mxu0 %v122
    %149 = vmatpush1.msra.mxu0 %v121
    %150 = vmatprep.subr.mxu0 %v124
    %151 = vmatpush1.msra.mxu0 %v123
    %152 = vmatprep.subr.mxu0 %v126
    %153 = vmatpush1.msra.mxu0 %v125
    %154 = vmatprep.subr.mxu0 %v128
    %155 = vmatpush1.msra.mxu0 %v127
    %156 = vmatprep.subr.mxu0 0.0
    %157 = vmatpush1.msra.mxu0 0.0
    %158 = vmatprep.subr.mxu0 0.0
    %159 = vmatpush1.msra.mxu0 0.0
    %160 = vmatprep.subr.mxu0 0.0
    %161 = vmatpush1.msra.mxu0 0.0
    %162 = vmatprep.subr.mxu0 0.0
    %163 = vmatpush1.msra.mxu0 0.0
    %164 = vmatprep.subr.mxu0 0.0
    %165 = vmatpush1.msra.mxu0 0.0
    %166 = vmatprep.subr.mxu0 0.0
    %167 = vmatpush1.msra.mxu0 0.0
    %168 = vmatprep.subr.mxu0 0.0
    %169 = vmatpush1.msra.mxu0 0.0
    %170 = vmatprep.subr.mxu0 0.0
    %171 = vmatpush1.msra.mxu0 0.0
    %172 = vmatprep.subr.mxu0 0.0
    %173 = vmatpush1.msra.mxu0 0.0
    %174 = vmatprep.subr.mxu0 0.0
    %175 = vmatpush1.msra.mxu0 0.0
    %176 = vmatprep.subr.mxu0 0.0
    %177 = vmatpush1.msra.mxu0 0.0
    %178 = vmatprep.subr.mxu0 0.0
    %179 = vmatpush1.msra.mxu0 0.0
    %180 = vmatprep.subr.mxu0 0.0
    %181 = vmatpush1.msra.mxu0 0.0
    %182 = vmatprep.subr.mxu0 0.0
    %183 = vmatpush1.msra.mxu0 0.0
    %184 = vmatprep.subr.mxu0 0.0
    %185 = vmatpush1.msra.mxu0 0.0
    %186 = vmatprep.subr.mxu0 0.0
    %187 = vmatpush1.msra.mxu0 0.0
    %188 = vmatprep.subr.mxu0 0.0
    %189 = vmatpush1.msra.mxu0 0.0
    %190 = vmatprep.subr.mxu0 0.0
    %191 = vmatpush1.msra.mxu0 0.0
    %192 = vmatprep.subr.mxu0 0.0
    %193 = vmatpush1.msra.mxu0 0.0
    %194 = vmatprep.subr.mxu0 0.0
    %195 = vmatpush1.msra.mxu0 0.0
    %196 = vmatprep.subr.mxu0 0.0
    %197 = vmatpush1.msra.mxu0 0.0
    %198 = vmatprep.subr.mxu0 0.0
    %199 = vmatpush1.msra.mxu0 0.0
    %200 = vmatprep.subr.mxu0 0.0
    %201 = vmatpush1.msra.mxu0 0.0
    %202 = vmatprep.subr.mxu0 0.0
    %203 = vmatpush1.msra.mxu0 0.0
    %204 = vmatprep.subr.mxu0 0.0
    %205 = vmatpush1.msra.mxu0 0.0
    %206 = vmatprep.subr.mxu0 0.0
    %207 = vmatpush1.msra.mxu0 0.0
    %208 = vmatprep.subr.mxu0 0.0
    %209 = vmatpush1.msra.mxu0 0.0
    %210 = vmatprep.subr.mxu0 0.0
    %211 = vmatpush1.msra.mxu0 0.0
    %212 = vmatprep.mubr.f32.mxu0 0.0
    %213 = vmatmul.mubr.f32.gmra.mrb[0].mxu0 %v143
    %v214 = vpop.f32.mrb[0].mxu0
    %v215 = vadd.f32 %v134, %v214
    %v216 = vpop.f32.mrb[0].mxu0
    %v217 = vadd.f32 %v138, %v216
    %218 = vmatprep.mubr.f32.mxu0 0.0
    %219 = vmatmul.mubr.f32.gmra.mrb[0].mxu0 %v146
    %v220 = vpop.f32.mrb[0].mxu0
    %v221 = vadd.f32 %v134, %v220
    %v222 = vpop.f32.mrb[0].mxu0
    %v223 = vadd.f32 %v138, %v222
    %224 = vdwg.mxu0
    %v225 = vadd.f32 %v215, %v217
    %226 = vadd.xlane.f32.xlu0 %v225
    %v227 = vpop.xlane.xlu0 %226
    %v228 = vadd.f32 %v221, %v223
    %229 = vadd.xlane.f32.xlu0 %v228
    %v230 = vpop.xlane.xlu0 %229
    %v231 = vrcp.pop 256.0
    %v232 = vmul.f32 %v227, %v231
    %v233 = vmul.f32 %v230, %v231
    %v234 = vsub.f32 %v215, %v232
    %v235 = vsub.f32 %v217, %v232
    %v236 = vsub.f32 %v221, %v233
    %v237 = vsub.f32 %v223, %v233
    %v238 = vmul.f32 %v234, %v234
    %v239 = vmul.f32 %v235, %v235
    %v240 = vmul.f32 %v236, %v236
    %v241 = vmul.f32 %v237, %v237
    %v242 = vadd.f32 %v238, %v239
    %243 = vadd.xlane.f32.xlu0 %v242
    %v244 = vpop.xlane.xlu0 %243
    %v245 = vadd.f32 %v240, %v241
    %246 = vadd.xlane.f32.xlu0 %v245
    %v247 = vpop.xlane.xlu0 %246
    %v248 = vmul.f32 %v244, %v231
    %v249 = vmul.f32 %v247, %v231
    %v250 = vadd.f32 %v248, 1e-05
    %v251 = vadd.f32 %v249, 1e-05
    %v252 = vrsqrt.pop %v250
    %v253 = vrsqrt.pop %v251
    %v254 = vmul.f32 %v234, %v252
    %v255 = vmul.f32 %v235, %v252
    %v256 = vmul.f32 %v236, %v253
    %v257 = vmul.f32 %v237, %v253
    %v258 = vld [vmem:[%s3] sm:$0x3]
    %v260 = vlaneseq
    %v261 = vshrl.u32 %v260, 7
    %v262 = vsub.s32 0, %v261
    %v263 = vrot.slane %v258, %v262
    %v264 = vlaneseq
    %v265 = vshrl.u32 %v264, 7
    %v266 = vsub.s32 1, %v265
    %v267 = vrot.slane %v258, %v266
    %v270 = vmul.f32 %v254, %v263
    %v271 = vmul.f32 %v255, %v267
    %v272 = vmul.f32 %v256, %v263
    %v273 = vmul.f32 %v257, %v267
    %v274 = vld [vmem:[%s4] sm:$0x3]
    %v276 = vlaneseq
    %v277 = vshrl.u32 %v276, 7
    %v278 = vsub.s32 0, %v277
    %v279 = vrot.slane %v274, %v278
    %v280 = vlaneseq
    %v281 = vshrl.u32 %v280, 7
    %v282 = vsub.s32 1, %v281
    %v283 = vrot.slane %v274, %v282
    %v286 = vadd.f32 %v270, %v279
    %v287 = vadd.f32 %v271, %v283
    %v288 = vadd.f32 %v272, %v279
    %v289 = vadd.f32 %v273, %v283
    %v290 = vmul.f32 %v286, 0.1
    %v291 = vmul.f32 %v287, 0.1
    %v292 = vmul.f32 %v288, 0.1
    %v293 = vmul.f32 %v289, 0.1
    %v294 = vmax.f32 %v286, %v290
    %v295 = vmax.f32 %v287, %v291
    %v296 = vmax.f32 %v288, %v292
    %v297 = vmax.f32 %v289, %v293
    %v298 = vld [vmem:[#allocation7] sm:$0xff]
    %v299 = vld [vmem:[#allocation7 + $0x8] sm:$0xff]
    %v300 = vld [vmem:[#allocation7 + $0x10] sm:$0xff]
    %v301 = vld [vmem:[#allocation7 + $0x18] sm:$0xff]
    %v302 = vld [vmem:[#allocation7 + $0x20] sm:$0xff]
    %v303 = vld [vmem:[#allocation7 + $0x28] sm:$0xff]
    %v304 = vld [vmem:[#allocation7 + $0x30] sm:$0xff]
    %v305 = vld [vmem:[#allocation7 + $0x38] sm:$0xff]
    %v306 = vld [vmem:[#allocation7 + $0x40] sm:$0xff]
    %v307 = vld [vmem:[#allocation7 + $0x48] sm:$0xff]
    %v308 = vld [vmem:[#allocation7 + $0x50] sm:$0xff]
    %v309 = vld [vmem:[#allocation7 + $0x58] sm:$0xff]
    %v310 = vld [vmem:[#allocation7 + $0x60] sm:$0xff]
    %v311 = vld [vmem:[#allocation7 + $0x68] sm:$0xff]
    %v312 = vld [vmem:[#allocation7 + $0x70] sm:$0xff]
    %v313 = vld [vmem:[#allocation7 + $0x78] sm:$0xff]
    %v314 = vld [vmem:[#allocation7 + $0x80] sm:$0xff]
    %v315 = vld [vmem:[#allocation7 + $0x88] sm:$0xff]
    %v316 = vld [vmem:[#allocation7 + $0x90] sm:$0xff]
    %v317 = vld [vmem:[#allocation7 + $0x98] sm:$0xff]
    %v318 = vld [vmem:[#allocation7 + $0xa0] sm:$0xff]
    %v319 = vld [vmem:[#allocation7 + $0xa8] sm:$0xff]
    %v320 = vld [vmem:[#allocation7 + $0xb0] sm:$0xff]
    %v321 = vld [vmem:[#allocation7 + $0xb8] sm:$0xff]
    %v322 = vld [vmem:[#allocation7 + $0xc0] sm:$0xff]
    %v323 = vld [vmem:[#allocation7 + $0xc8] sm:$0xff]
    %v324 = vld [vmem:[#allocation7 + $0xd0] sm:$0xff]
    %v325 = vld [vmem:[#allocation7 + $0xd8] sm:$0xff]
    %v326 = vld [vmem:[#allocation7 + $0xe0] sm:$0xff]
    %v327 = vld [vmem:[#allocation7 + $0xe8] sm:$0xff]
    %v328 = vld [vmem:[#allocation7 + $0xf0] sm:$0xff]
    %v329 = vld [vmem:[#allocation7 + $0xf8] sm:$0xff]
    %v330 = vld [vmem:[#allocation7 + $0x100] sm:$0xff]
    %v331 = vld [vmem:[#allocation7 + $0x108] sm:$0xff]
    %v332 = vld [vmem:[#allocation7 + $0x110] sm:$0xff]
    %v333 = vld [vmem:[#allocation7 + $0x118] sm:$0xff]
    %v334 = vld [vmem:[#allocation7 + $0x120] sm:$0xff]
    %v335 = vld [vmem:[#allocation7 + $0x128] sm:$0xff]
    %v336 = vld [vmem:[#allocation7 + $0x130] sm:$0xff]
    %v337 = vld [vmem:[#allocation7 + $0x138] sm:$0xff]
    %v338 = vld [vmem:[#allocation7 + $0x140] sm:$0xff]
    %v339 = vld [vmem:[#allocation7 + $0x148] sm:$0xff]
    %v340 = vld [vmem:[#allocation7 + $0x150] sm:$0xff]
    %v341 = vld [vmem:[#allocation7 + $0x158] sm:$0xff]
    %v342 = vld [vmem:[#allocation7 + $0x160] sm:$0xff]
    %v343 = vld [vmem:[#allocation7 + $0x168] sm:$0xff]
    %v344 = vld [vmem:[#allocation7 + $0x170] sm:$0xff]
    %v345 = vld [vmem:[#allocation7 + $0x178] sm:$0xff]
    %v346 = vld [vmem:[#allocation7 + $0x180] sm:$0xff]
    %v347 = vld [vmem:[#allocation7 + $0x188] sm:$0xff]
    %v348 = vld [vmem:[#allocation7 + $0x190] sm:$0xff]
    %v349 = vld [vmem:[#allocation7 + $0x198] sm:$0xff]
    %v350 = vld [vmem:[#allocation7 + $0x1a0] sm:$0xff]
    %v351 = vld [vmem:[#allocation7 + $0x1a8] sm:$0xff]
    %v352 = vld [vmem:[#allocation7 + $0x1b0] sm:$0xff]
    %v353 = vld [vmem:[#allocation7 + $0x1b8] sm:$0xff]
    %v354 = vld [vmem:[#allocation7 + $0x1c0] sm:$0xff]
    %v355 = vld [vmem:[#allocation7 + $0x1c8] sm:$0xff]
    %v356 = vld [vmem:[#allocation7 + $0x1d0] sm:$0xff]
    %v357 = vld [vmem:[#allocation7 + $0x1d8] sm:$0xff]
    %v358 = vld [vmem:[#allocation7 + $0x1e0] sm:$0xff]
    %v359 = vld [vmem:[#allocation7 + $0x1e8] sm:$0xff]
    %v360 = vld [vmem:[#allocation7 + $0x1f0] sm:$0xff]
    %v361 = vld [vmem:[#allocation7 + $0x1f8] sm:$0xff]
    %v362 = vld [vmem:[%s6] sm:$0x3]
    %v364 = vlaneseq
    %v365 = vshrl.u32 %v364, 7
    %v366 = vsub.s32 0, %v365
    %v367 = vrot.slane %v362, %v366
    %v368 = vlaneseq
    %v369 = vshrl.u32 %v368, 7
    %v370 = vsub.s32 1, %v369
    %v371 = vrot.slane %v362, %v370
    %374 = vmatprep.subr.mxu0 %v299
    %375 = vmatpush1.msra.mxu0 %v298
    %376 = vmatprep.subr.mxu0 %v301
    %377 = vmatpush1.msra.mxu0 %v300
    %378 = vmatprep.subr.mxu0 %v303
    %379 = vmatpush1.msra.mxu0 %v302
    %380 = vmatprep.subr.mxu0 %v305
    %381 = vmatpush1.msra.mxu0 %v304
    %382 = vmatprep.subr.mxu0 %v307
    %383 = vmatpush1.msra.mxu0 %v306
    %384 = vmatprep.subr.mxu0 %v309
    %385 = vmatpush1.msra.mxu0 %v308
    %386 = vmatprep.subr.mxu0 %v311
    %387 = vmatpush1.msra.mxu0 %v310
    %388 = vmatprep.subr.mxu0 %v313
    %389 = vmatpush1.msra.mxu0 %v312
    %390 = vmatprep.subr.mxu0 %v315
    %391 = vmatpush1.msra.mxu0 %v314
    %392 = vmatprep.subr.mxu0 %v317
    %393 = vmatpush1.msra.mxu0 %v316
    %394 = vmatprep.subr.mxu0 %v319
    %395 = vmatpush1.msra.mxu0 %v318
    %396 = vmatprep.subr.mxu0 %v321
    %397 = vmatpush1.msra.mxu0 %v320
    %398 = vmatprep.subr.mxu0 %v323
    %399 = vmatpush1.msra.mxu0 %v322
    %400 = vmatprep.subr.mxu0 %v325
    %401 = vmatpush1.msra.mxu0 %v324
    %402 = vmatprep.subr.mxu0 %v327
    %403 = vmatpush1.msra.mxu0 %v326
    %404 = vmatprep.subr.mxu0 %v329
    %405 = vmatpush1.msra.mxu0 %v328
    %406 = vmatprep.subr.mxu0 %v331
    %407 = vmatpush1.msra.mxu0 %v330
    %408 = vmatprep.subr.mxu0 %v333
    %409 = vmatpush1.msra.mxu0 %v332
    %410 = vmatprep.subr.mxu0 %v335
    %411 = vmatpush1.msra.mxu0 %v334
    %412 = vmatprep.subr.mxu0 %v337
    %413 = vmatpush1.msra.mxu0 %v336
    %414 = vmatprep.subr.mxu0 %v339
    %415 = vmatpush1.msra.mxu0 %v338
    %416 = vmatprep.subr.mxu0 %v341
    %417 = vmatpush1.msra.mxu0 %v340
    %418 = vmatprep.subr.mxu0 %v343
    %419 = vmatpush1.msra.mxu0 %v342
    %420 = vmatprep.subr.mxu0 %v345
    %421 = vmatpush1.msra.mxu0 %v344
    %422 = vmatprep.subr.mxu0 %v347
    %423 = vmatpush1.msra.mxu0 %v346
    %424 = vmatprep.subr.mxu0 %v349
    %425 = vmatpush1.msra.mxu0 %v348
    %426 = vmatprep.subr.mxu0 %v351
    %427 = vmatpush1.msra.mxu0 %v350
    %428 = vmatprep.subr.mxu0 %v353
    %429 = vmatpush1.msra.mxu0 %v352
    %430 = vmatprep.subr.mxu0 %v355
    %431 = vmatpush1.msra.mxu0 %v354
    %432 = vmatprep.subr.mxu0 %v357
    %433 = vmatpush1.msra.mxu0 %v356
    %434 = vmatprep.subr.mxu0 %v359
    %435 = vmatpush1.msra.mxu0 %v358
    %436 = vmatprep.subr.mxu0 %v361
    %437 = vmatpush1.msra.mxu0 %v360
    %438 = vmatprep.mubr.f32.mxu0 %v295
    %439 = vmatmul.mubr.f32.gmra.mrb[0].mxu0 %v294
    %v440 = vpop.f32.mrb[0].mxu0
    %v441 = vadd.f32 %v367, %v440
    %v442 = vpop.f32.mrb[0].mxu0
    %v443 = vadd.f32 %v371, %v442
    %444 = vmatprep.mubr.f32.mxu0 %v297
    %445 = vmatmul.mubr.f32.gmra.mrb[0].mxu0 %v296
    %v446 = vpop.f32.mrb[0].mxu0
    %v447 = vadd.f32 %v367, %v446
    %v448 = vpop.f32.mrb[0].mxu0
    %v449 = vadd.f32 %v371, %v448
    %450 = vdwg.mxu0
    %v451 = vadd.f32 %v441, %v443
    %452 = vadd.xlane.f32.xlu0 %v451
    %v453 = vpop.xlane.xlu0 %452
    %v454 = vadd.f32 %v447, %v449
    %455 = vadd.xlane.f32.xlu0 %v454
    %v456 = vpop.xlane.xlu0 %455
    %v457 = vmul.f32 %v453, %v231
    %v458 = vmul.f32 %v456, %v231
    %v459 = vsub.f32 %v441, %v457
    %v460 = vsub.f32 %v443, %v457
    %v461 = vsub.f32 %v447, %v458
    %v462 = vsub.f32 %v449, %v458
    %v463 = vmul.f32 %v459, %v459
    %v464 = vmul.f32 %v460, %v460
    %v465 = vmul.f32 %v461, %v461
    %v466 = vmul.f32 %v462, %v462
    %v467 = vadd.f32 %v463, %v464
    %468 = vadd.xlane.f32.xlu0 %v467
    %v469 = vpop.xlane.xlu0 %468
    %v470 = vadd.f32 %v465, %v466
    %471 = vadd.xlane.f32.xlu0 %v470
    %v472 = vpop.xlane.xlu0 %471
    %v473 = vmul.f32 %v469, %v231
    %v474 = vmul.f32 %v472, %v231
    %v475 = vadd.f32 %v473, 1e-05
    %v476 = vadd.f32 %v474, 1e-05
    %v477 = vrsqrt.pop %v475
    %v478 = vrsqrt.pop %v476
    %v479 = vmul.f32 %v459, %v477
    %v480 = vmul.f32 %v460, %v477
    %v481 = vmul.f32 %v461, %v478
    %v482 = vmul.f32 %v462, %v478
    %v483 = vld [vmem:[%s7] sm:$0x3]
    %v485 = vlaneseq
    %v486 = vshrl.u32 %v485, 7
    %v487 = vsub.s32 0, %v486
    %v488 = vrot.slane %v483, %v487
    %v489 = vlaneseq
    %v490 = vshrl.u32 %v489, 7
    %v491 = vsub.s32 1, %v490
    %v492 = vrot.slane %v483, %v491
    %v495 = vmul.f32 %v479, %v488
    %v496 = vmul.f32 %v480, %v492
    %v497 = vmul.f32 %v481, %v488
    %v498 = vmul.f32 %v482, %v492
    %v499 = vld [vmem:[%s8] sm:$0x3]
    %v501 = vlaneseq
    %v502 = vshrl.u32 %v501, 7
    %v503 = vsub.s32 0, %v502
    %v504 = vrot.slane %v499, %v503
    %v505 = vlaneseq
    %v506 = vshrl.u32 %v505, 7
    %v507 = vsub.s32 1, %v506
    %v508 = vrot.slane %v499, %v507
    %v511 = vadd.f32 %v495, %v504
    %v512 = vadd.f32 %v496, %v508
    %v513 = vadd.f32 %v497, %v504
    %v514 = vadd.f32 %v498, %v508
    %v515 = vmul.f32 %v511, 0.1
    %v516 = vmul.f32 %v512, 0.1
    %v517 = vmul.f32 %v513, 0.1
    %v518 = vmul.f32 %v514, 0.1
    %v519 = vmax.f32 %v511, %v515
    %v520 = vmax.f32 %v512, %v516
    %v521 = vmax.f32 %v513, %v517
    %v522 = vmax.f32 %v514, %v518
    %v523 = vld [vmem:[#allocation8] sm:$0xff]
    %v524 = vld [vmem:[#allocation8 + $0x8] sm:$0xff]
    %v525 = vld [vmem:[#allocation8 + $0x10] sm:$0xff]
    %v526 = vld [vmem:[#allocation8 + $0x18] sm:$0xff]
    %v527 = vld [vmem:[#allocation8 + $0x20] sm:$0xff]
    %v528 = vld [vmem:[#allocation8 + $0x28] sm:$0xff]
    %v529 = vld [vmem:[#allocation8 + $0x30] sm:$0xff]
    %v530 = vld [vmem:[#allocation8 + $0x38] sm:$0xff]
    %v531 = vld [vmem:[#allocation8 + $0x40] sm:$0xff]
    %v532 = vld [vmem:[#allocation8 + $0x48] sm:$0xff]
    %v533 = vld [vmem:[#allocation8 + $0x50] sm:$0xff]
    %v534 = vld [vmem:[#allocation8 + $0x58] sm:$0xff]
    %v535 = vld [vmem:[#allocation8 + $0x60] sm:$0xff]
    %v536 = vld [vmem:[#allocation8 + $0x68] sm:$0xff]
    %v537 = vld [vmem:[#allocation8 + $0x70] sm:$0xff]
    %v538 = vld [vmem:[#allocation8 + $0x78] sm:$0xff]
    %v539 = vld [vmem:[#allocation8 + $0x80] sm:$0xff]
    %v540 = vld [vmem:[#allocation8 + $0x88] sm:$0xff]
    %v541 = vld [vmem:[#allocation8 + $0x90] sm:$0xff]
    %v542 = vld [vmem:[#allocation8 + $0x98] sm:$0xff]
    %v543 = vld [vmem:[#allocation8 + $0xa0] sm:$0xff]
    %v544 = vld [vmem:[#allocation8 + $0xa8] sm:$0xff]
    %v545 = vld [vmem:[#allocation8 + $0xb0] sm:$0xff]
    %v546 = vld [vmem:[#allocation8 + $0xb8] sm:$0xff]
    %v547 = vld [vmem:[#allocation8 + $0xc0] sm:$0xff]
    %v548 = vld [vmem:[#allocation8 + $0xc8] sm:$0xff]
    %v549 = vld [vmem:[#allocation8 + $0xd0] sm:$0xff]
    %v550 = vld [vmem:[#allocation8 + $0xd8] sm:$0xff]
    %v551 = vld [vmem:[#allocation8 + $0xe0] sm:$0xff]
    %v552 = vld [vmem:[#allocation8 + $0xe8] sm:$0xff]
    %v553 = vld [vmem:[#allocation8 + $0xf0] sm:$0xff]
    %v554 = vld [vmem:[#allocation8 + $0xf8] sm:$0xff]
    %v555 = vld [vmem:[#allocation8 + $0x100] sm:$0xff]
    %v556 = vld [vmem:[#allocation8 + $0x108] sm:$0xff]
    %v557 = vld [vmem:[#allocation8 + $0x110] sm:$0xff]
    %v558 = vld [vmem:[#allocation8 + $0x118] sm:$0xff]
    %v559 = vld [vmem:[#allocation8 + $0x120] sm:$0xff]
    %v560 = vld [vmem:[#allocation8 + $0x128] sm:$0xff]
    %v561 = vld [vmem:[#allocation8 + $0x130] sm:$0xff]
    %v562 = vld [vmem:[#allocation8 + $0x138] sm:$0xff]
    %v563 = vld [vmem:[#allocation8 + $0x140] sm:$0xff]
    %v564 = vld [vmem:[#allocation8 + $0x148] sm:$0xff]
    %v565 = vld [vmem:[#allocation8 + $0x150] sm:$0xff]
    %v566 = vld [vmem:[#allocation8 + $0x158] sm:$0xff]
    %v567 = vld [vmem:[#allocation8 + $0x160] sm:$0xff]
    %v568 = vld [vmem:[#allocation8 + $0x168] sm:$0xff]
    %v569 = vld [vmem:[#allocation8 + $0x170] sm:$0xff]
    %v570 = vld [vmem:[#allocation8 + $0x178] sm:$0xff]
    %v571 = vld [vmem:[#allocation8 + $0x180] sm:$0xff]
    %v572 = vld [vmem:[#allocation8 + $0x188] sm:$0xff]
    %v573 = vld [vmem:[#allocation8 + $0x190] sm:$0xff]
    %v574 = vld [vmem:[#allocation8 + $0x198] sm:$0xff]
    %v575 = vld [vmem:[#allocation8 + $0x1a0] sm:$0xff]
    %v576 = vld [vmem:[#allocation8 + $0x1a8] sm:$0xff]
    %v577 = vld [vmem:[#allocation8 + $0x1b0] sm:$0xff]
    %v578 = vld [vmem:[#allocation8 + $0x1b8] sm:$0xff]
    %v579 = vld [vmem:[#allocation8 + $0x1c0] sm:$0xff]
    %v580 = vld [vmem:[#allocation8 + $0x1c8] sm:$0xff]
    %v581 = vld [vmem:[#allocation8 + $0x1d0] sm:$0xff]
    %v582 = vld [vmem:[#allocation8 + $0x1d8] sm:$0xff]
    %v583 = vld [vmem:[#allocation8 + $0x1e0] sm:$0xff]
    %v584 = vld [vmem:[#allocation8 + $0x1e8] sm:$0xff]
    %v585 = vld [vmem:[#allocation8 + $0x1f0] sm:$0xff]
    %v586 = vld [vmem:[#allocation8 + $0x1f8] sm:$0xff]
    %v587 = vld [vmem:[%s10] sm:$0x3]
    %v589 = vlaneseq
    %v590 = vshrl.u32 %v589, 7
    %v591 = vsub.s32 0, %v590
    %v592 = vrot.slane %v587, %v591
    %v593 = vlaneseq
    %v594 = vshrl.u32 %v593, 7
    %v595 = vsub.s32 1, %v594
    %v596 = vrot.slane %v587, %v595
    %599 = vmatprep.subr.mxu0 %v524
    %600 = vmatpush1.msra.mxu0 %v523
    %601 = vmatprep.subr.mxu0 %v526
    %602 = vmatpush1.msra.mxu0 %v525
    %603 = vmatprep.subr.mxu0 %v528
    %604 = vmatpush1.msra.mxu0 %v527
    %605 = vmatprep.subr.mxu0 %v530
    %606 = vmatpush1.msra.mxu0 %v529
    %607 = vmatprep.subr.mxu0 %v532
    %608 = vmatpush1.msra.mxu0 %v531
    %609 = vmatprep.subr.mxu0 %v534
    %610 = vmatpush1.msra.mxu0 %v533
    %611 = vmatprep.subr.mxu0 %v536
    %612 = vmatpush1.msra.mxu0 %v535
    %613 = vmatprep.subr.mxu0 %v538
    %614 = vmatpush1.msra.mxu0 %v537
    %615 = vmatprep.subr.mxu0 %v540
    %616 = vmatpush1.msra.mxu0 %v539
    %617 = vmatprep.subr.mxu0 %v542
    %618 = vmatpush1.msra.mxu0 %v541
    %619 = vmatprep.subr.mxu0 %v544
    %620 = vmatpush1.msra.mxu0 %v543
    %621 = vmatprep.subr.mxu0 %v546
    %622 = vmatpush1.msra.mxu0 %v545
    %623 = vmatprep.subr.mxu0 %v548
    %624 = vmatpush1.msra.mxu0 %v547
    %625 = vmatprep.subr.mxu0 %v550
    %626 = vmatpush1.msra.mxu0 %v549
    %627 = vmatprep.subr.mxu0 %v552
    %628 = vmatpush1.msra.mxu0 %v551
    %629 = vmatprep.subr.mxu0 %v554
    %630 = vmatpush1.msra.mxu0 %v553
    %631 = vmatprep.subr.mxu0 %v556
    %632 = vmatpush1.msra.mxu0 %v555
    %633 = vmatprep.subr.mxu0 %v558
    %634 = vmatpush1.msra.mxu0 %v557
    %635 = vmatprep.subr.mxu0 %v560
    %636 = vmatpush1.msra.mxu0 %v559
    %637 = vmatprep.subr.mxu0 %v562
    %638 = vmatpush1.msra.mxu0 %v561
    %639 = vmatprep.subr.mxu0 %v564
    %640 = vmatpush1.msra.mxu0 %v563
    %641 = vmatprep.subr.mxu0 %v566
    %642 = vmatpush1.msra.mxu0 %v565
    %643 = vmatprep.subr.mxu0 %v568
    %644 = vmatpush1.msra.mxu0 %v567
    %645 = vmatprep.subr.mxu0 %v570
    %646 = vmatpush1.msra.mxu0 %v569
    %647 = vmatprep.subr.mxu0 %v572
    %648 = vmatpush1.msra.mxu0 %v571
    %649 = vmatprep.subr.mxu0 %v574
    %650 = vmatpush1.msra.mxu0 %v573
    %651 = vmatprep.subr.mxu0 %v576
    %652 = vmatpush1.msra.mxu0 %v575
    %653 = vmatprep.subr.mxu0 %v578
    %654 = vmatpush1.msra.mxu0 %v577
    %655 = vmatprep.subr.mxu0 %v580
    %656 = vmatpush1.msra.mxu0 %v579
    %657 = vmatprep.subr.mxu0 %v582
    %658 = vmatpush1.msra.mxu0 %v581
    %659 = vmatprep.subr.mxu0 %v584
    %660 = vmatpush1.msra.mxu0 %v583
    %661 = vmatprep.subr.mxu0 %v586
    %662 = vmatpush1.msra.mxu0 %v585
    %663 = vmatprep.mubr.f32.mxu0 %v520
    %664 = vmatmul.mubr.f32.gmra.mrb[0].mxu0 %v519
    %v665 = vpop.f32.mrb[0].mxu0
    %v666 = vadd.f32 %v592, %v665
    %v667 = vpop.f32.mrb[0].mxu0
    %v668 = vadd.f32 %v596, %v667
    %669 = vmatprep.mubr.f32.mxu0 %v522
    %670 = vmatmul.mubr.f32.gmra.mrb[0].mxu0 %v521
    %v671 = vpop.f32.mrb[0].mxu0
    %v672 = vadd.f32 %v592, %v671
    %v673 = vpop.f32.mrb[0].mxu0
    %v674 = vadd.f32 %v596, %v673
    %675 = vdwg.mxu0
    %v676 = vadd.f32 %v666, %v668
    %677 = vadd.xlane.f32.xlu0 %v676
    %v678 = vpop.xlane.xlu0 %677
    %v679 = vadd.f32 %v672, %v674
    %680 = vadd.xlane.f32.xlu0 %v679
    %v681 = vpop.xlane.xlu0 %680
    %v682 = vmul.f32 %v678, %v231
    %v683 = vmul.f32 %v681, %v231
    %v684 = vsub.f32 %v666, %v682
    %v685 = vsub.f32 %v668, %v682
    %v686 = vsub.f32 %v672, %v683
    %v687 = vsub.f32 %v674, %v683
    %v688 = vmul.f32 %v684, %v684
    %v689 = vmul.f32 %v685, %v685
    %v690 = vmul.f32 %v686, %v686
    %v691 = vmul.f32 %v687, %v687
    %v692 = vadd.f32 %v688, %v689
    %693 = vadd.xlane.f32.xlu0 %v692
    %v694 = vpop.xlane.xlu0 %693
    %v695 = vadd.f32 %v690, %v691
    %696 = vadd.xlane.f32.xlu0 %v695
    %v697 = vpop.xlane.xlu0 %696
    %v698 = vmul.f32 %v694, %v231
    %v699 = vmul.f32 %v697, %v231
    %v700 = vadd.f32 %v698, 1e-05
    %v701 = vadd.f32 %v699, 1e-05
    %v702 = vrsqrt.pop %v700
    %v703 = vrsqrt.pop %v701
    %v704 = vmul.f32 %v684, %v702
    %v705 = vmul.f32 %v685, %v702
    %v706 = vmul.f32 %v686, %v703
    %v707 = vmul.f32 %v687, %v703
    %v708 = vld [vmem:[%s11] sm:$0x3]
    %v710 = vlaneseq
    %v711 = vshrl.u32 %v710, 7
    %v712 = vsub.s32 0, %v711
    %v713 = vrot.slane %v708, %v712
    %v714 = vlaneseq
    %v715 = vshrl.u32 %v714, 7
    %v716 = vsub.s32 1, %v715
    %v717 = vrot.slane %v708, %v716
    %v720 = vmul.f32 %v704, %v713
    %v721 = vmul.f32 %v705, %v717
    %v722 = vmul.f32 %v706, %v713
    %v723 = vmul.f32 %v707, %v717
    %v724 = vld [vmem:[%s12] sm:$0x3]
    %v726 = vlaneseq
    %v727 = vshrl.u32 %v726, 7
    %v728 = vsub.s32 0, %v727
    %v729 = vrot.slane %v724, %v728
    %v730 = vlaneseq
    %v731 = vshrl.u32 %v730, 7
    %v732 = vsub.s32 1, %v731
    %v733 = vrot.slane %v724, %v732
    %v736 = vadd.f32 %v720, %v729
    %v737 = vadd.f32 %v721, %v733
    %v738 = vadd.f32 %v722, %v729
    %v739 = vadd.f32 %v723, %v733
    %v740 = vmul.f32 %v736, 0.1
    %v741 = vmul.f32 %v737, 0.1
    %v742 = vmul.f32 %v738, 0.1
    %v743 = vmul.f32 %v739, 0.1
    %v744 = vmax.f32 %v736, %v740
    %v745 = vmax.f32 %v737, %v741
    %v746 = vmax.f32 %v738, %v742
    %v747 = vmax.f32 %v739, %v743
    %v748 = vld [vmem:[#allocation10] sm:$0xff]
    %v749 = vld [vmem:[#allocation10 + $0x8] sm:$0xff]
    %v750 = vld [vmem:[#allocation10 + $0x10] sm:$0xff]
    %v751 = vld [vmem:[#allocation10 + $0x18] sm:$0xff]
    %v752 = vld [vmem:[#allocation10 + $0x20] sm:$0xff]
    %v753 = vld [vmem:[#allocation10 + $0x28] sm:$0xff]
    %v754 = vld [vmem:[#allocation10 + $0x30] sm:$0xff]
    %v755 = vld [vmem:[#allocation10 + $0x38] sm:$0xff]
    %v756 = vld [vmem:[#allocation10 + $0x40] sm:$0xff]
    %v757 = vld [vmem:[#allocation10 + $0x48] sm:$0xff]
    %v758 = vld [vmem:[#allocation10 + $0x50] sm:$0xff]
    %v759 = vld [vmem:[#allocation10 + $0x58] sm:$0xff]
    %v760 = vld [vmem:[#allocation10 + $0x60] sm:$0xff]
    %v761 = vld [vmem:[#allocation10 + $0x68] sm:$0xff]
    %v762 = vld [vmem:[#allocation10 + $0x70] sm:$0xff]
    %v763 = vld [vmem:[#allocation10 + $0x78] sm:$0xff]
    %v764 = vld [vmem:[#allocation10 + $0x80] sm:$0xff]
    %v765 = vld [vmem:[#allocation10 + $0x88] sm:$0xff]
    %v766 = vld [vmem:[#allocation10 + $0x90] sm:$0xff]
    %v767 = vld [vmem:[#allocation10 + $0x98] sm:$0xff]
    %v768 = vld [vmem:[#allocation10 + $0xa0] sm:$0xff]
    %v769 = vld [vmem:[#allocation10 + $0xa8] sm:$0xff]
    %v770 = vld [vmem:[#allocation10 + $0xb0] sm:$0xff]
    %v771 = vld [vmem:[#allocation10 + $0xb8] sm:$0xff]
    %v772 = vld [vmem:[#allocation10 + $0xc0] sm:$0xff]
    %v773 = vld [vmem:[#allocation10 + $0xc8] sm:$0xff]
    %v774 = vld [vmem:[#allocation10 + $0xd0] sm:$0xff]
    %v775 = vld [vmem:[#allocation10 + $0xd8] sm:$0xff]
    %v776 = vld [vmem:[#allocation10 + $0xe0] sm:$0xff]
    %v777 = vld [vmem:[#allocation10 + $0xe8] sm:$0xff]
    %v778 = vld [vmem:[#allocation10 + $0xf0] sm:$0xff]
    %v779 = vld [vmem:[#allocation10 + $0xf8] sm:$0xff]
    %v780 = vld [vmem:[%s14] sm:$0x1]
    %v782 = vlaneseq
    %v783 = vshrl.u32 %v782, 7
    %v784 = vsub.s32 0, %v783
    %v785 = vrot.slane %v780, %v784
    %787 = vmatprep.subr.mxu0 0.0
    %788 = vmatpush1.msra.mxu0 %v748
    %789 = vmatprep.subr.mxu0 0.0
    %790 = vmatpush1.msra.mxu0 %v749
    %791 = vmatprep.subr.mxu0 0.0
    %792 = vmatpush1.msra.mxu0 %v750
    %793 = vmatprep.subr.mxu0 0.0
    %794 = vmatpush1.msra.mxu0 %v751
    %795 = vmatprep.subr.mxu0 0.0
    %796 = vmatpush1.msra.mxu0 %v752
    %797 = vmatprep.subr.mxu0 0.0
    %798 = vmatpush1.msra.mxu0 %v753
    %799 = vmatprep.subr.mxu0 0.0
    %800 = vmatpush1.msra.mxu0 %v754
    %801 = vmatprep.subr.mxu0 0.0
    %802 = vmatpush1.msra.mxu0 %v755
    %803 = vmatprep.subr.mxu0 0.0
    %804 = vmatpush1.msra.mxu0 %v756
    %805 = vmatprep.subr.mxu0 0.0
    %806 = vmatpush1.msra.mxu0 %v757
    %807 = vmatprep.subr.mxu0 0.0
    %808 = vmatpush1.msra.mxu0 %v758
    %809 = vmatprep.subr.mxu0 0.0
    %810 = vmatpush1.msra.mxu0 %v759
    %811 = vmatprep.subr.mxu0 0.0
    %812 = vmatpush1.msra.mxu0 %v760
    %813 = vmatprep.subr.mxu0 0.0
    %814 = vmatpush1.msra.mxu0 %v761
    %815 = vmatprep.subr.mxu0 0.0
    %816 = vmatpush1.msra.mxu0 %v762
    %817 = vmatprep.subr.mxu0 0.0
    %818 = vmatpush1.msra.mxu0 %v763
    %819 = vmatprep.subr.mxu0 0.0
    %820 = vmatpush1.msra.mxu0 %v764
    %821 = vmatprep.subr.mxu0 0.0
    %822 = vmatpush1.msra.mxu0 %v765
    %823 = vmatprep.subr.mxu0 0.0
    %824 = vmatpush1.msra.mxu0 %v766
    %825 = vmatprep.subr.mxu0 0.0
    %826 = vmatpush1.msra.mxu0 %v767
    %827 = vmatprep.subr.mxu0 0.0
    %828 = vmatpush1.msra.mxu0 %v768
    %829 = vmatprep.subr.mxu0 0.0
    %830 = vmatpush1.msra.mxu0 %v769
    %831 = vmatprep.subr.mxu0 0.0
    %832 = vmatpush1.msra.mxu0 %v770
    %833 = vmatprep.subr.mxu0 0.0
    %834 = vmatpush1.msra.mxu0 %v771
    %835 = vmatprep.subr.mxu0 0.0
    %836 = vmatpush1.msra.mxu0 %v772
    %837 = vmatprep.subr.mxu0 0.0
    %838 = vmatpush1.msra.mxu0 %v773
    %839 = vmatprep.subr.mxu0 0.0
    %840 = vmatpush1.msra.mxu0 %v774
    %841 = vmatprep.subr.mxu0 0.0
    %842 = vmatpush1.msra.mxu0 %v775
    %843 = vmatprep.subr.mxu0 0.0
    %844 = vmatpush1.msra.mxu0 %v776
    %845 = vmatprep.subr.mxu0 0.0
    %846 = vmatpush1.msra.mxu0 %v777
    %847 = vmatprep.subr.mxu0 0.0
    %848 = vmatpush1.msra.mxu0 %v778
    %849 = vmatprep.subr.mxu0 0.0
    %850 = vmatpush1.msra.mxu0 %v779
    %851 = vmatprep.mubr.f32.mxu0 %v745
    %852 = vmatmul.mubr.f32.gmra.mrb[0].mxu0 %v744
    %v853 = vpop.f32.mrb[0].mxu0
    %v854 = vadd.f32 %v785, %v853
    %v855 = vpop.f32.mrb[0].mxu0
    %856 = vmatprep.mubr.f32.mxu0 %v747
    %857 = vmatmul.mubr.f32.gmra.mrb[0].mxu0 %v746
    %v858 = vpop.f32.mrb[0].mxu0
    %v859 = vadd.f32 %v785, %v858
    %v860 = vpop.f32.mrb[0].mxu0
    %861 = vdwg.mxu0
    %862 = vst [vmem:[#allocation11] sm:$0xff] %v854
    %863 = vst [vmem:[#allocation11 + $0x8] sm:$0xff] %v859
    // Predicated region
    $region82: #{tpu_custom_call.1} parent=1 // pred_check
      _
    $region83: #{tpu_custom_call.1} parent=1 // pred_check_branch
      %865 = sbr.rel (0) target = $region85
    $region84: #{tpu_custom_call.1} parent=1 // pred_region
      %s867 = ssub.s32 256, 256
      %868 = vsyncadd [#allocation4], %s867
      %s869 = sshll.u32 [#allocation11], 4
      %s870 = int_to_ptr.vmem [resolvable:$true] %s869
      %875 = dma.vmem_to_hbm [thread:$0]  %s870, 256, %s15, [#allocation4], 128, 128, 8
    $region85: #{tpu_custom_call.1} parent=1 // pred_fallthru
      _
    // Predicated region
    $region86: #{tpu_custom_call.1} parent=1 // pred_check
      _
    $region87: #{tpu_custom_call.1} parent=1 // pred_check_branch
      %877 = sbr.rel (0) target = $region89
    $region88: #{tpu_custom_call.1} parent=1 // pred_region
      %878 = dma.done [#allocation4], 256
    $region89: #{tpu_custom_call.1} parent=1 // pred_fallthru
      _
    %879 = vsyncpa [#allocation3], 1
    %880 = vsyncpa [#allocation6], 1
    %881 = vsyncpa [#allocation9], 1
    %882 = vsyncpa [#allocation4], 1

</llo_original>
